<compile_context>
chip_gen: v6e
topology: v6e:2x2x1
jax: 0.10.0
libtpu: 0.0.40
codegen_flags: <defaults>
</compile_context>

<pallas_src>
import jax
import jax.numpy as jnp
from jax.experimental import pallas as pl
from jax.experimental.pallas import tpu as pltpu


def _round_up(x, m):
    return ((x + m - 1) // m) * m


# -------- kernel 1: dropout apply + linear transform + D^{-1/2} row scaling ---------
def linear_kernel(x_ref, mask_ref, d_ref, w_ref, o_ref):
    # dropout multiply in f32 (v5e VPU has no bf16 VALU); 1/keep_prob folded into W
    xd = x_ref[...].astype(jnp.float32) * mask_ref[...].astype(jnp.float32)
    xw = jnp.dot(xd.astype(jnp.bfloat16), w_ref[...],
                 preferred_element_type=jnp.float32)
    # fold the "column" factor of A_hat (d_j^{-1/2}) into XW rows, in f32, then one
    # bf16 store (lane-dense).
    o_ref[...] = (d_ref[...] * xw).astype(o_ref.dtype)


# -------- kernel 2: (A + I) @ XW', row normalization + bias in the epilogue ---------
def make_aggregate_kernel(tile_k, xw_resident):
    def aggregate_kernel(a_ref, xw_ref, d_ref, b_ref, o_ref):
        k = pl.program_id(1)

        @pl.when(k == 0)
        def _():
            # output block index ignores k -> resident accumulator, no scratch needed
            o_ref[...] = jnp.zeros_like(o_ref)

        if xw_resident:
            # XW' lives fully in VMEM; slice the current k window instead of
            # re-streaming the whole array for every row tile.
            start = pl.multiple_of(k * tile_k, tile_k)
            xw = xw_ref[pl.ds(start, tile_k), :]
        else:
            xw = xw_ref[...]

        # int8 {0,1} adjacency -> bf16 for the MXU (exact; casts land on idle VPU slots)
        a = a_ref[...].astype(jnp.float32).astype(jnp.bfloat16)
        o_ref[...] += jnp.dot(a, xw, preferred_element_type=jnp.float32)

        @pl.when(k == pl.num_programs(1) - 1)
        def _():
            # apply the "row" factor d_i^{-1/2} in f32 and add the bias, in-place
            o_ref[...] = d_ref[...] * o_ref[...] + b_ref[...]

    return aggregate_kernel


def gcn_layer(x, edge_index, weight_t, bias, dropout_mask, dropout_p):
    """Pallas implementation of GCNLayer.forward (training mode).

    Args:
      x:            [num_nodes, in_dim] float32 node features
      edge_index:   [2, num_edges] int32 COO edges (row 0 = src, row 1 = dst)
      weight_t:     [in_dim, out_dim] float32 (PyG weight, transposed layout)
      bias:         [1, out_dim] (or [out_dim]) float32
      dropout_mask: [num_nodes, in_dim] {0,1} keep-mask
      dropout_p:    python float dropout probability
    Returns:
      [num_nodes, out_dim] float32 node embeddings
    """
    num_nodes, in_dim = x.shape
    out_dim = weight_t.shape[1]
    keep_prob = 1.0 - float(dropout_p)

    # ---------------- tiling / padding choices ----------------
    np_ = _round_up(num_nodes, 256)           # padded node axis (rows AND agg columns)
    fin_p = _round_up(in_dim, 128)            # lane-dense feature dims
    fout_p = _round_up(out_dim, 128)

    # >= 2 row tiles whenever possible so v7x's 2 TensorCores both get work;
    # 128/256 keep MXU + int8 (32,128) sublane tiling happy.
    tile_m = 128 if np_ == 256 else 256
    # aggregation reduction tile: 512 when it divides (better HBM efficiency, 4x
    # fewer grid steps), else 256.
    tile_k = 512 if np_ % 512 == 0 else 256
    # tile W columns only when a resident W block would strain v7x's 64 MiB VMEM
    tile_fout = fout_p if fin_p * fout_p * 2 <= 8 * 2**20 else 512
    while fout_p % tile_fout:
        tile_fout //= 2
    n_row, n_k, n_fout = np_ // tile_m, np_ // tile_k, fout_p // tile_fout

    # keep XW' fully VMEM-resident in kernel 2 when its (double-buffered) bf16
    # footprint is modest; otherwise fall back to streaming per k tile.
    xw_resident = np_ * fout_p * 2 * 2 <= 24 * 2**20

    # rough VMEM budgets (double-buffered streams) -> explicit scoped limit
    k1_need = 2 * (2 * tile_m * fin_p * 2 + tile_m * 4
                   + fin_p * tile_fout * 2 + tile_m * tile_fout * 2)
    xw_need = (2 * np_ * fout_p * 2) if xw_resident else (2 * tile_k * fout_p * 2)
    k2_need = 2 * (tile_m * tile_k + tile_m * 4 + fout_p * 4
                   + tile_m * fout_p * 4) + xw_need
    vmem_limit = int(min(64 * 2**20, max(32 * 2**20, 2 * max(k1_need, k2_need))))

    # ---------------- adjacency: padded, unnormalized (A + I) as int8 {0,1} ----------
    src = edge_index[0].astype(jnp.int32)
    dst = edge_index[1].astype(jnp.int32)
    diag = jnp.arange(num_nodes, dtype=jnp.int32)
    one = jnp.ones((), jnp.int8)
    a_p = jnp.zeros((np_, np_), jnp.int8)
    a_p = a_p.at[dst, src].max(one)           # edge j -> i lands in row i (coalesced)
    a_p = a_p.at[diag, diag].max(one)         # self loops
    # TODO(synk): for large sparse graphs replace this dense O(N^2) adjacency with a
    # CSR gather aggregation kernel (scalar-prefetched row offsets + manual
    # double-buffered DMA of XW rows) so kernel-2 HBM traffic is O(num_edges*out_dim).

    deg = jnp.sum(a_p[:num_nodes].astype(jnp.float32), axis=1)
    d_inv_sqrt = jnp.where(deg > 0.0, jax.lax.rsqrt(deg), 0.0)
    d_p = jnp.zeros((np_, 1), jnp.float32).at[:num_nodes, 0].set(d_inv_sqrt)

    # ---------------- padded bf16 operands (halve the HBM reads) ---------------------
    x_p = jnp.zeros((np_, fin_p), jnp.bfloat16).at[:num_nodes, :in_dim].set(
        x.astype(jnp.bfloat16))
    m_p = jnp.zeros((np_, fin_p), jnp.bfloat16).at[:num_nodes, :in_dim].set(
        dropout_mask.astype(jnp.bfloat16))
    # fold inverted-dropout scale into W: (x*mask/keep) @ W == (x*mask) @ (W/keep)
    w_scaled = (weight_t.astype(jnp.float32) / keep_prob).astype(jnp.bfloat16)
    w_p = jnp.zeros((fin_p, fout_p), jnp.bfloat16).at[:in_dim, :out_dim].set(w_scaled)
    b_p = jnp.zeros((1, fout_p), jnp.float32).at[0, :out_dim].set(
        jnp.asarray(bias, jnp.float32).reshape(-1))

    # ---------------- kernel 1: XW' = d^{-1/2} * dropout(x) @ (W/keep) ---------------
    xw = pl.pallas_call(
        linear_kernel,
        out_shape=jax.ShapeDtypeStruct((np_, fout_p), jnp.bfloat16),
        grid_spec=pltpu.PrefetchScalarGridSpec(
            num_scalar_prefetch=0,
            grid=(n_row, n_fout),
            in_specs=[
                pl.BlockSpec((tile_m, fin_p), lambda i, j: (i, 0)),
                pl.BlockSpec((tile_m, fin_p), lambda i, j: (i, 0)),
                pl.BlockSpec((tile_m, 1), lambda i, j: (i, 0)),
                pl.BlockSpec((fin_p, tile_fout), lambda i, j: (0, j)),
            ],
            out_specs=pl.BlockSpec((tile_m, tile_fout), lambda i, j: (i, j)),
        ),
        compiler_params=pltpu.CompilerParams(
            dimension_semantics=("parallel", "parallel"),
            vmem_limit_bytes=vmem_limit),
    )(x_p, m_p, d_p, w_p)

    # ---------------- kernel 2: H = d^{-1/2} * ((A+I) @ XW') + b ---------------------
    if xw_resident:
        xw_spec = pl.BlockSpec((np_, fout_p), lambda i, k: (0, 0))
    else:
        xw_spec = pl.BlockSpec((tile_k, fout_p), lambda i, k: (k, 0))

    h = pl.pallas_call(
        make_aggregate_kernel(tile_k, xw_resident),
        out_shape=jax.ShapeDtypeStruct((np_, fout_p), jnp.float32),
        grid_spec=pltpu.PrefetchScalarGridSpec(
            num_scalar_prefetch=0,
            grid=(n_row, n_k),
            in_specs=[
                pl.BlockSpec((tile_m, tile_k), lambda i, k: (i, k)),
                xw_spec,
                pl.BlockSpec((tile_m, 1), lambda i, k: (i, 0)),
                pl.BlockSpec((1, fout_p), lambda i, k: (0, 0)),
            ],
            out_specs=pl.BlockSpec((tile_m, fout_p), lambda i, k: (i, 0)),
        ),
        compiler_params=pltpu.CompilerParams(
            dimension_semantics=("parallel", "arbitrary"),
            vmem_limit_bytes=vmem_limit),
    )(a_p, xw, d_p, b_p)

    return h[:num_nodes, :out_dim]


if __name__ == "__main__":
    key = jax.random.PRNGKey(0)
    k_x, k_w, k_drop = jax.random.split(key, 3)

    num_nodes, in_dim, out_dim = 16, 32, 32
    dropout_p = 0.1

    # node features
    x = jax.random.normal(k_x, (num_nodes, in_dim), dtype=jnp.float32)

    # deterministic small graph: bidirectional ring
    idx = jnp.arange(num_nodes, dtype=jnp.int32)
    nxt = (idx + 1) % num_nodes
    edge_index = jnp.stack(
        [jnp.concatenate([idx, nxt]), jnp.concatenate([nxt, idx])], axis=0)

    # GCNConv params: glorot weight [in_dim, out_dim] (transposed layout), zero bias
    limit = (6.0 / (in_dim + out_dim)) ** 0.5
    weight_t = jax.random.uniform(
        k_w, (in_dim, out_dim), jnp.float32, minval=-limit, maxval=limit)
    bias = jnp.zeros((1, out_dim), jnp.float32)

    # deterministic dropout keep-mask (training-mode dropout, inverted scaling)
    keep_mask = jax.random.bernoulli(
        k_drop, 1.0 - dropout_p, (num_nodes, in_dim)).astype(jnp.float32)

    h = gcn_layer(x, edge_index, weight_t, bias, keep_mask, dropout_p)
    jax.block_until_ready(h)
    assert h.shape == (num_nodes, out_dim) and h.dtype == jnp.float32

    # sanity check against a pure-JAX f32 reference (bf16 MXU path -> loose tolerance)
    src, dst = edge_index[0], edge_index[1]
    adj = jnp.zeros((num_nodes, num_nodes), jnp.float32).at[dst, src].set(1.0)
    adj = jnp.maximum(adj, jnp.eye(num_nodes, dtype=jnp.float32))
    dis = 1.0 / jnp.sqrt(adj.sum(axis=1))
    a_ref = dis[:, None] * adj * dis[None, :]
    ref = a_ref @ ((x * keep_mask / (1.0 - dropout_p)) @ weight_t) + bias
    err = jnp.max(jnp.abs(h - ref))
    assert err < 5e-2, f"mismatch vs reference: {err}"

    print("KERNEL_OK")
</pallas_src>

<mosaic_0001>
module attributes {stable_mosaic.version = 11 : i64} {
  func.func @linear_kernel(%arg0: i32, %arg1: i32, %arg2: memref<128x128xbf16, #tpu.memory_space<vmem>>, %arg3: memref<128x128xbf16, #tpu.memory_space<vmem>>, %arg4: memref<128x1xf32, #tpu.memory_space<vmem>>, %arg5: memref<128x128xbf16, #tpu.memory_space<vmem>>, %arg6: memref<128x128xbf16, #tpu.memory_space<vmem>>) attributes {dimension_semantics = [#tpu.dimension_semantics<parallel>, #tpu.dimension_semantics<parallel>], iteration_bounds = array<i64: 2, 1>, scalar_prefetch = 0 : i64, scratch_operands = 0 : i64, tpu.core_type = #tpu.core_type<tc>, window_params = [{transform_indices = @transform_0, window_bounds = array<i64: 128, 128>}, {transform_indices = @transform_1, window_bounds = array<i64: 128, 128>}, {transform_indices = @transform_2, window_bounds = array<i64: 128, 1>}, {transform_indices = @transform_3, window_bounds = array<i64: 128, 128>}, {transform_indices = @transform_4, window_bounds = array<i64: 128, 128>}]} {
    %c0 = arith.constant 0 : index
    %c0_0 = arith.constant 0 : index
    %0 = vector.load %arg2[%c0, %c0_0] : memref<128x128xbf16, #tpu.memory_space<vmem>>, vector<128x128xbf16>
    %1 = arith.extf %0 : vector<128x128xbf16> to vector<128x128xf32>
    %c0_1 = arith.constant 0 : index
    %c0_2 = arith.constant 0 : index
    %2 = vector.load %arg3[%c0_1, %c0_2] : memref<128x128xbf16, #tpu.memory_space<vmem>>, vector<128x128xbf16>
    %3 = arith.extf %2 : vector<128x128xbf16> to vector<128x128xf32>
    %4 = arith.mulf %1, %3 : vector<128x128xf32>
    %5 = arith.truncf %4 : vector<128x128xf32> to vector<128x128xbf16>
    %c0_3 = arith.constant 0 : index
    %c0_4 = arith.constant 0 : index
    %6 = vector.load %arg5[%c0_3, %c0_4] : memref<128x128xbf16, #tpu.memory_space<vmem>>, vector<128x128xbf16>
    %cst = arith.constant dense<0.000000e+00> : vector<128x128xf32>
    %7 = tpu.matmul %5, %6, %cst {dimension_numbers = #tpu.dot_dimension_numbers<[1], [0], [0], [1], [0, 0, 1, 1], [], []>} : vector<128x128xbf16>, vector<128x128xbf16>, vector<128x128xf32> -> vector<128x128xf32>
    %c0_5 = arith.constant 0 : index
    %c0_6 = arith.constant 0 : index
    %8 = vector.load %arg4[%c0_5, %c0_6] : memref<128x1xf32, #tpu.memory_space<vmem>>, vector<128x1xf32>
    %9 = vector.broadcast %8 : vector<128x1xf32> to vector<128x128xf32>
    %10 = arith.mulf %9, %7 : vector<128x128xf32>
    %11 = arith.truncf %10 : vector<128x128xf32> to vector<128x128xbf16>
    %c0_7 = arith.constant 0 : index
    %c0_8 = arith.constant 0 : index
    %12 = vector.load %arg6[%c0_7, %c0_8] : memref<128x128xbf16, #tpu.memory_space<vmem>>, vector<128x128xbf16>
    tpu.vector_store %arg6[%c0_7, %c0_8], %11 {strides = array<i32>} : memref<128x128xbf16, #tpu.memory_space<vmem>>, vector<128x128xbf16>,
    return
  }
  func.func @transform_0(%arg0: i32, %arg1: i32) -> (i32, i32) {
    %c0_i32 = arith.constant 0 : i32
    %c0_i32_0 = arith.constant 0 : i32
    return %arg0, %c0_i32 : i32, i32
  }
  func.func @transform_1(%arg0: i32, %arg1: i32) -> (i32, i32) {
    %c0_i32 = arith.constant 0 : i32
    %c0_i32_0 = arith.constant 0 : i32
    return %arg0, %c0_i32 : i32, i32
  }
  func.func @transform_2(%arg0: i32, %arg1: i32) -> (i32, i32) {
    %c0_i32 = arith.constant 0 : i32
    %c0_i32_0 = arith.constant 0 : i32
    return %arg0, %c0_i32 : i32, i32
  }
  func.func @transform_3(%arg0: i32, %arg1: i32) -> (i32, i32) {
    %c0_i32 = arith.constant 0 : i32
    %c0_i32_0 = arith.constant 0 : i32
    return %c0_i32, %arg1 : i32, i32
  }
  func.func @transform_4(%arg0: i32, %arg1: i32) -> (i32, i32) {
    %c0_i32 = arith.constant 0 : i32
    return %arg0, %arg1 : i32, i32
  }
}

</mosaic_0001>

<llo_original>
// kernel: tpu_custom_call.1
$region0: #{tpu_custom_call.1}
  #allocation0 [shape = 'u32[]', space=smem, size = 0x4, offset = 0x4, fixed_abs, tag = 'smem constant byte address 0x4 - core index']
  #allocation1 [shape = 'u32[144,128]{1,0:T(1,128)}', space=vmem, size = 0x12000, scoped, tag = 'internal scratch']
  %s0 = inlined_call_operand.vmem [shape: bf16[256,128], index: 0, kind: input, shape index: {}]
  %s1 = inlined_call_operand.vmem [shape: bf16[256,128], index: 1, kind: input, shape index: {}]
  %s2 = inlined_call_operand.vmem [shape: f32[256,1], index: 2, kind: input, shape index: {}]
  %s3 = inlined_call_operand.hbm [shape: bf16[128,128], index: 3, kind: input, shape index: {}]
  %s4 = inlined_call_operand.hbm [shape: bf16[256,128], index: 4, kind: output, shape index: {}]
  %s5 = sld [smem:[#allocation0]]
  $region53: #{tpu_custom_call.1} parent=0
    _
  %s7 = ssub.s32 1, %s5
  %s8 = scalar_select 0, %s7, %s5
  $region1: #{tpu_custom_call.1} parent=0
    #allocation2 [shape = 'u8[32768]{0}', space=vmem, size = 0x8000, scoped, tag = 'input window, operand 3, single buffered']
    #allocation3 [shape = 's32[2]{0}', space=sflag, size = 0x8, scoped, tag = 'scoped memory for tpu_custom_call.1']
    #allocation4 [shape = 's32[2]{0}', space=sflag, size = 0x8, scoped, tag = 'scoped memory for tpu_custom_call.1']
    #allocation5 [shape = 'u8[65536]{0}', space=vmem, size = 0x10000, scoped, tag = 'output window, operand 0']
    %9 = vsyncpa [#allocation3], 0
    %10 = vsyncpa [#allocation4], 0
    %s11 = scalar_lea.sflag [#allocation4], 1
    %12 = vsyncpa %s11, 0
    loop: start=0, step=1, limit=4
    $region2: #{tpu_custom_call.1} parent=1 // loop_pre_header
      _
    $region3: #{tpu_custom_call.1} parent=1 // loop_header
      %s14 = sphi 0, %s18
      %p15 = scmp.ge.s32.totalorder %s14, 4
      %s21 = sphi 0, %s33
      %s22 = sphi 0, %s29
      %s23 = sphi 0, %s21
      %s24 = sphi 0, %s22
      %s25 = sphi 0, %s23
      %s26 = sphi 0, %s24
      %s36 = sphi 0, %s38
      %s39 = sphi 0, %s36
      %s40 = sphi 0, %s39
      %s56 = sphi 0, %s40
      %s62 = sphi 0, %s64
      %s65 = sphi 0, %s62
      %s66 = sphi 0, %s65
      %s82 = sphi 0, %s66
      %s88 = sphi 0, %s90
      %s91 = sphi 0, %s88
      %s92 = sphi 0, %s91
      %s108 = sphi 0, %s92
      %s114 = sphi 0, %s116
      %s117 = sphi 0, %s114
      %s118 = sphi 0, %s117
      %s134 = sphi 0, %s118
      %s142 = sphi 0, %s144
      %s145 = sphi 0, %s142
      %s146 = sphi 0, %s145
      %s162 = sphi 0, %s146
    $region4: #{tpu_custom_call.1} parent=1 // loop_header_branch
      %17 = sbr.rel (%p15) target = $region8
    $region5: #{tpu_custom_call.1} parent=1 // loop_body
      %s19 = ssub.s32 %s14, 1
      %s20 = ssub.s32 %s14, 2
      %s27 = sadd.s32 1, %s22
      %p28 = scmp.ge.s32.totalorder %s27, 1
      %s29 = scalar_select %p28, 0, %s27
      %s30 = sadd.s32 1, %s21
      %s31 = scalar_select %p28, %s30, %s21
      %p32 = scmp.ge.s32.totalorder %s31, 2
      %s33 = scalar_select %p32, 0, %s31
      %s34 = ssub.s32 %s21, %s33
      %p35 = scmp.eq.s32.totalorder %s34, 0
      %s37 = sadd.s32 %s36, 1
      %s38 = scalar_select %p35, %s36, %s37
      %p41 = pneg %p35
      %p42 = scmp.eq.s32.totalorder %s14, 1
      %p43 = por %p41, %p42
      %p44 = scmp.ne.s32.totalorder %s36, %s39
      %p45 = scmp.eq.s32.totalorder %s14, 0
      %p46 = por %p44, %p45
      %p47 = scmp.ne.s32.totalorder %s36, %s39
      %p48 = scmp.eq.s32.totalorder %s19, 1
      %p49 = por %p47, %p48
      %p50 = scmp.ne.s32.totalorder %s39, %s40
      %p51 = scmp.eq.s32.totalorder %s19, 0
      %p52 = por %p50, %p51
      %p53 = scmp.ne.s32.totalorder %s39, %s40
      %p54 = scmp.eq.s32.totalorder %s20, 1
      %p55 = por %p53, %p54
      %p57 = scmp.ne.s32.totalorder %s40, %s56
      %p58 = scmp.eq.s32.totalorder %s20, 0
      %p59 = por %p57, %p58
      %s60 = ssub.s32 %s21, %s33
      %p61 = scmp.eq.s32.totalorder %s60, 0
      %s63 = sadd.s32 %s62, 1
      %s64 = scalar_select %p61, %s62, %s63
      %p67 = pneg %p61
      %p68 = scmp.eq.s32.totalorder %s14, 1
      %p69 = por %p67, %p68
      %p70 = scmp.ne.s32.totalorder %s62, %s65
      %p71 = scmp.eq.s32.totalorder %s14, 0
      %p72 = por %p70, %p71
      %p73 = scmp.ne.s32.totalorder %s62, %s65
      %p74 = scmp.eq.s32.totalorder %s19, 1
      %p75 = por %p73, %p74
      %p76 = scmp.ne.s32.totalorder %s65, %s66
      %p77 = scmp.eq.s32.totalorder %s19, 0
      %p78 = por %p76, %p77
      %p79 = scmp.ne.s32.totalorder %s65, %s66
      %p80 = scmp.eq.s32.totalorder %s20, 1
      %p81 = por %p79, %p80
      %p83 = scmp.ne.s32.totalorder %s66, %s82
      %p84 = scmp.eq.s32.totalorder %s20, 0
      %p85 = por %p83, %p84
      %s86 = ssub.s32 %s21, %s33
      %p87 = scmp.eq.s32.totalorder %s86, 0
      %s89 = sadd.s32 %s88, 1
      %s90 = scalar_select %p87, %s88, %s89
      %p93 = pneg %p87
      %p94 = scmp.eq.s32.totalorder %s14, 1
      %p95 = por %p93, %p94
      %p96 = scmp.ne.s32.totalorder %s88, %s91
      %p97 = scmp.eq.s32.totalorder %s14, 0
      %p98 = por %p96, %p97
      %p99 = scmp.ne.s32.totalorder %s88, %s91
      %p100 = scmp.eq.s32.totalorder %s19, 1
      %p101 = por %p99, %p100
      %p102 = scmp.ne.s32.totalorder %s91, %s92
      %p103 = scmp.eq.s32.totalorder %s19, 0
      %p104 = por %p102, %p103
      %p105 = scmp.ne.s32.totalorder %s91, %s92
      %p106 = scmp.eq.s32.totalorder %s20, 1
      %p107 = por %p105, %p106
      %p109 = scmp.ne.s32.totalorder %s92, %s108
      %p110 = scmp.eq.s32.totalorder %s20, 0
      %p111 = por %p109, %p110
      %s112 = ssub.s32 %s22, %s29
      %p113 = scmp.eq.s32.totalorder %s112, 0
      %s115 = sadd.s32 %s114, 1
      %s116 = scalar_select %p113, %s114, %s115
      %p119 = pneg %p113
      %p120 = scmp.eq.s32.totalorder %s14, 1
      %p121 = por %p119, %p120
      %p122 = scmp.ne.s32.totalorder %s114, %s117
      %p123 = scmp.eq.s32.totalorder %s14, 0
      %p124 = por %p122, %p123
      %p125 = scmp.ne.s32.totalorder %s114, %s117
      %p126 = scmp.eq.s32.totalorder %s19, 1
      %p127 = por %p125, %p126
      %p128 = scmp.ne.s32.totalorder %s117, %s118
      %p129 = scmp.eq.s32.totalorder %s19, 0
      %p130 = por %p128, %p129
      %p131 = scmp.ne.s32.totalorder %s117, %s118
      %p132 = scmp.eq.s32.totalorder %s20, 1
      %p133 = por %p131, %p132
      %p135 = scmp.ne.s32.totalorder %s118, %s134
      %p136 = scmp.eq.s32.totalorder %s20, 0
      %p137 = por %p135, %p136
      %s138 = ssub.s32 %s21, %s33
      %s139 = ssub.s32 %s22, %s29
      %s140 = sor.u32 %s138, %s139
      %p141 = scmp.eq.s32.totalorder %s140, 0
      %s143 = sadd.s32 %s142, 1
      %s144 = scalar_select %p141, %s142, %s143
      %p147 = pneg %p141
      %p148 = scmp.eq.s32.totalorder %s14, 1
      %p149 = por %p147, %p148
      %p150 = scmp.ne.s32.totalorder %s142, %s145
      %p151 = scmp.eq.s32.totalorder %s14, 0
      %p152 = por %p150, %p151
      %p153 = scmp.ne.s32.totalorder %s142, %s145
      %p154 = scmp.eq.s32.totalorder %s19, 1
      %p155 = por %p153, %p154
      %p156 = scmp.ne.s32.totalorder %s145, %s146
      %p157 = scmp.eq.s32.totalorder %s19, 0
      %p158 = por %p156, %p157
      %p159 = scmp.ne.s32.totalorder %s145, %s146
      %p160 = scmp.eq.s32.totalorder %s20, 1
      %p161 = por %p159, %p160
      %p163 = scmp.ne.s32.totalorder %s146, %s162
      %p164 = scmp.eq.s32.totalorder %s20, 0
      %p165 = por %p163, %p164
      %p166 = scmp.le.s32.totalorder 1, %s14
      %p167 = scmp.lt.s32.totalorder %s14, 3
      %p168 = pnand %p166, %p167
      %p169 = pneg %p168
      // Predicated region
      $region9: #{tpu_custom_call.1} parent=5 // pred_check
        _
      $region10: #{tpu_custom_call.1} parent=5 // pred_check_branch
        %171 = sbr.rel (%p168) target = $region12
      $region11: #{tpu_custom_call.1} parent=5 // pred_region
        %s172 = ssub.s32 %s14, 1
        // Predicated region
        $region13: #{tpu_custom_call.1} parent=11 // pred_check
          %p173 = pneg %p130
        $region14: #{tpu_custom_call.1} parent=11 // pred_check_branch
          %175 = sbr.rel (%p173) target = $region16
        $region15: #{tpu_custom_call.1} parent=11 // pred_region
          %s177 = ssub.s32 1024, 1024
          %178 = vsyncadd [#allocation3], %s177
          %s179 = smul.addr %s24, 64
          %s180 = scalar_lea.hbm %s3, %s179
          %s181 = sshll.u32 [#allocation2], 4
          %s182 = int_to_ptr.vmem [resolvable:$true] %s181
          %187 = dma.hbm_to_vmem [thread:$0]  %s180, 1024, %s182, [#allocation3], 64, 64, 4
        $region16: #{tpu_custom_call.1} parent=11 // pred_fallthru
          _
      $region12: #{tpu_custom_call.1} parent=5 // pred_fallthru
        _
      %p188 = scmp.lt.s32.totalorder %s14, 2
      // Predicated region
      $region17: #{tpu_custom_call.1} parent=5 // pred_check
        %p189 = pneg %p188
      $region18: #{tpu_custom_call.1} parent=5 // pred_check_branch
        %191 = sbr.rel (%p189) target = $region20
      $region19: #{tpu_custom_call.1} parent=5 // pred_region
        // Predicated region
        $region21: #{tpu_custom_call.1} parent=19 // pred_check
          %p192 = pneg %p46
        $region22: #{tpu_custom_call.1} parent=19 // pred_check_branch
          %194 = sbr.rel (%p192) target = $region24
        $region23: #{tpu_custom_call.1} parent=19 // pred_region
          %s195 = smul.u32 16, %s21
          %p196 = scmp.lt.s32.totalorder %s195, 31
          %s197 = scalar_select %p196, %s195, 31
          %s198 = smul.addr %s197, 4
          %s199 = scalar_lea.vmem %s0, %s198
          %s200 = smul.u32 16, %s21
        $region24: #{tpu_custom_call.1} parent=19 // pred_fallthru
          _
        // Predicated region
        $region25: #{tpu_custom_call.1} parent=19 // pred_check
          %p201 = pneg %p72
        $region26: #{tpu_custom_call.1} parent=19 // pred_check_branch
          %203 = sbr.rel (%p201) target = $region28
        $region27: #{tpu_custom_call.1} parent=19 // pred_region
          %s204 = smul.u32 16, %s21
          %p205 = scmp.lt.s32.totalorder %s204, 31
          %s206 = scalar_select %p205, %s204, 31
          %s207 = smul.addr %s206, 4
          %s208 = scalar_lea.vmem %s1, %s207
          %s209 = smul.u32 16, %s21
        $region28: #{tpu_custom_call.1} parent=19 // pred_fallthru
          _
        // Predicated region
        $region29: #{tpu_custom_call.1} parent=19 // pred_check
          %p210 = pneg %p98
        $region30: #{tpu_custom_call.1} parent=19 // pred_check_branch
          %212 = sbr.rel (%p210) target = $region32
        $region31: #{tpu_custom_call.1} parent=19 // pred_region
          %s213 = smul.u32 16, %s21
          %p214 = scmp.lt.s32.totalorder %s213, 31
          %s215 = scalar_select %p214, %s213, 31
          %s216 = smul.addr %s215, 8
          %s217 = scalar_lea.vmem %s2, %s216
          %s218 = smul.u32 16, %s21
        $region32: #{tpu_custom_call.1} parent=19 // pred_fallthru
          _
      $region20: #{tpu_custom_call.1} parent=5 // pred_fallthru
        _
      %p219 = scmp.le.s32.totalorder 1, %s14
      %p220 = scmp.lt.s32.totalorder %s14, 3
      %p221 = pnand %p219, %p220
      %p222 = pneg %p221
      // Predicated region
      $region33: #{tpu_custom_call.1} parent=5 // pred_check
        _
      $region34: #{tpu_custom_call.1} parent=5 // pred_check_branch
        %224 = sbr.rel (%p221) target = $region36
      $region35: #{tpu_custom_call.1} parent=5 // pred_region
        %s225 = ssub.s32 %s14, 1
        // Predicated region
        $region37: #{tpu_custom_call.1} parent=35 // pred_check
          %p226 = pneg %p130
        $region38: #{tpu_custom_call.1} parent=35 // pred_check_branch
          %228 = sbr.rel (%p226) target = $region40
        $region39: #{tpu_custom_call.1} parent=35 // pred_region
          %229 = dma.done [#allocation3], 1024
        $region40: #{tpu_custom_call.1} parent=35 // pred_fallthru
          _
        %s230 = smul.u32 16, %s23
        %p231 = scmp.lt.s32.totalorder %s230, 31
        %s232 = scalar_select %p231, %s230, 31
        %s233 = smul.addr %s232, 4
        %s234 = scalar_lea.vmem %s0, %s233
        %p235 = pneg %p52
        %p236 = pneg %p49
        %s237 = smul.u32 16, %s23
        %p238 = scmp.lt.s32.totalorder %s237, 31
        %s239 = scalar_select %p238, %s237, 31
        %s240 = smul.addr %s239, 4
        %s241 = scalar_lea.vmem %s1, %s240
        %p242 = pneg %p78
        %p243 = pneg %p75
        %s244 = smul.u32 16, %s23
        %p245 = scmp.lt.s32.totalorder %s244, 31
        %s246 = scalar_select %p245, %s244, 31
        %s247 = smul.addr %s246, 8
        %s248 = scalar_lea.vmem %s2, %s247
        %p249 = pneg %p104
        %p250 = pneg %p101
        %p251 = pneg %p130
        %p252 = pneg %p127
        %p253 = pneg %p158
        %p254 = pneg %p155
        %s255 = sand.u32 %s145, 1
        %s256 = scalar_lea.sflag [#allocation4], %s255
        %s257 = sand.u32 %s145, 1
        %s258 = smul.addr %s257, 64
        %s259 = scalar_lea.vmem [#allocation5], %s258
        %s260 = smul.u32 16, %s23
        %p261 = scmp.lt.s32.totalorder %s260, 31
        %s262 = scalar_select %p261, %s260, 31
        %s263 = smul.addr %s262, 4
        %s264 = scalar_lea.vmem %s0, %s263
        %s265 = smul.u32 16, %s23
        %s266 = smul.u32 16, %s23
        %p267 = scmp.lt.s32.totalorder %s266, 31
        %s268 = scalar_select %p267, %s266, 31
        %s269 = smul.addr %s268, 4
        %s270 = scalar_lea.vmem %s1, %s269
        %s271 = smul.u32 16, %s23
        %s272 = smul.u32 16, %s23
        %p273 = scmp.lt.s32.totalorder %s272, 31
        %s274 = scalar_select %p273, %s272, 31
        %s275 = smul.addr %s274, 8
        %s276 = scalar_lea.vmem %s2, %s275
        %s277 = smul.u32 16, %s23
        %s278 = smul.u32 16, %s23
        %v280 = vld [vmem:[%s264] sm:$0xf]
        %v281 = vld [vmem:[%s264 + $0x4] sm:$0xf]
        %v282 = vld [vmem:[%s264 + $0x8] sm:$0xf]
        %v283 = vld [vmem:[%s264 + $0xc] sm:$0xf]
        %v284 = vld [vmem:[%s264 + $0x10] sm:$0xf]
        %v285 = vld [vmem:[%s264 + $0x14] sm:$0xf]
        %v286 = vld [vmem:[%s264 + $0x18] sm:$0xf]
        %v287 = vld [vmem:[%s264 + $0x1c] sm:$0xf]
        %v288 = vld [vmem:[%s264 + $0x20] sm:$0xf]
        %v289 = vld [vmem:[%s264 + $0x24] sm:$0xf]
        %v290 = vld [vmem:[%s264 + $0x28] sm:$0xf]
        %v291 = vld [vmem:[%s264 + $0x2c] sm:$0xf]
        %v292 = vld [vmem:[%s264 + $0x30] sm:$0xf]
        %v293 = vld [vmem:[%s264 + $0x34] sm:$0xf]
        %v294 = vld [vmem:[%s264 + $0x38] sm:$0xf]
        %v295 = vld [vmem:[%s264 + $0x3c] sm:$0xf]
        %v296 = vunpack.c.l.bf16 %v280
        %v297 = vunpack.c.l.bf16 %v281
        %v298 = vunpack.c.l.bf16 %v282
        %v299 = vunpack.c.l.bf16 %v283
        %v300 = vunpack.c.l.bf16 %v284
        %v301 = vunpack.c.l.bf16 %v285
        %v302 = vunpack.c.l.bf16 %v286
        %v303 = vunpack.c.l.bf16 %v287
        %v304 = vunpack.c.l.bf16 %v288
        %v305 = vunpack.c.l.bf16 %v289
        %v306 = vunpack.c.l.bf16 %v290
        %v307 = vunpack.c.l.bf16 %v291
        %v308 = vunpack.c.l.bf16 %v292
        %v309 = vunpack.c.l.bf16 %v293
        %v310 = vunpack.c.l.bf16 %v294
        %v311 = vunpack.c.l.bf16 %v295
        %v312 = vld [vmem:[%s270] sm:$0xf]
        %v313 = vld [vmem:[%s270 + $0x4] sm:$0xf]
        %v314 = vld [vmem:[%s270 + $0x8] sm:$0xf]
        %v315 = vld [vmem:[%s270 + $0xc] sm:$0xf]
        %v316 = vld [vmem:[%s270 + $0x10] sm:$0xf]
        %v317 = vld [vmem:[%s270 + $0x14] sm:$0xf]
        %v318 = vld [vmem:[%s270 + $0x18] sm:$0xf]
        %v319 = vld [vmem:[%s270 + $0x1c] sm:$0xf]
        %v320 = vld [vmem:[%s270 + $0x20] sm:$0xf]
        %v321 = vld [vmem:[%s270 + $0x24] sm:$0xf]
        %v322 = vld [vmem:[%s270 + $0x28] sm:$0xf]
        %v323 = vld [vmem:[%s270 + $0x2c] sm:$0xf]
        %v324 = vld [vmem:[%s270 + $0x30] sm:$0xf]
        %v325 = vld [vmem:[%s270 + $0x34] sm:$0xf]
        %v326 = vld [vmem:[%s270 + $0x38] sm:$0xf]
        %v327 = vld [vmem:[%s270 + $0x3c] sm:$0xf]
        %v328 = vunpack.c.l.bf16 %v312
        %v329 = vunpack.c.l.bf16 %v313
        %v330 = vunpack.c.l.bf16 %v314
        %v331 = vunpack.c.l.bf16 %v315
        %v332 = vunpack.c.l.bf16 %v316
        %v333 = vunpack.c.l.bf16 %v317
        %v334 = vunpack.c.l.bf16 %v318
        %v335 = vunpack.c.l.bf16 %v319
        %v336 = vunpack.c.l.bf16 %v320
        %v337 = vunpack.c.l.bf16 %v321
        %v338 = vunpack.c.l.bf16 %v322
        %v339 = vunpack.c.l.bf16 %v323
        %v340 = vunpack.c.l.bf16 %v324
        %v341 = vunpack.c.l.bf16 %v325
        %v342 = vunpack.c.l.bf16 %v326
        %v343 = vunpack.c.l.bf16 %v327
        %v344 = vmul.f32 %v296, %v328
        %v345 = vmul.f32 %v297, %v329
        %v346 = vmul.f32 %v298, %v330
        %v347 = vmul.f32 %v299, %v331
        %v348 = vmul.f32 %v300, %v332
        %v349 = vmul.f32 %v301, %v333
        %v350 = vmul.f32 %v302, %v334
        %v351 = vmul.f32 %v303, %v335
        %v352 = vmul.f32 %v304, %v336
        %v353 = vmul.f32 %v305, %v337
        %v354 = vmul.f32 %v306, %v338
        %v355 = vmul.f32 %v307, %v339
        %v356 = vmul.f32 %v308, %v340
        %v357 = vmul.f32 %v309, %v341
        %v358 = vmul.f32 %v310, %v342
        %v359 = vmul.f32 %v311, %v343
        %v360 = vpack.c.bf16 %v345, %v344
        %v361 = vpack.c.bf16 %v347, %v346
        %v362 = vpack.c.bf16 %v349, %v348
        %v363 = vpack.c.bf16 %v351, %v350
        %v364 = vpack.c.bf16 %v353, %v352
        %v365 = vpack.c.bf16 %v355, %v354
        %v366 = vpack.c.bf16 %v357, %v356
        %v367 = vpack.c.bf16 %v359, %v358
        %v368 = vld [vmem:[#allocation2] sm:$0xf]
        %v369 = vld [vmem:[#allocation2 + $0x4] sm:$0xf]
        %v370 = vld [vmem:[#allocation2 + $0x8] sm:$0xf]
        %v371 = vld [vmem:[#allocation2 + $0xc] sm:$0xf]
        %v372 = vld [vmem:[#allocation2 + $0x10] sm:$0xf]
        %v373 = vld [vmem:[#allocation2 + $0x14] sm:$0xf]
        %v374 = vld [vmem:[#allocation2 + $0x18] sm:$0xf]
        %v375 = vld [vmem:[#allocation2 + $0x1c] sm:$0xf]
        %v376 = vld [vmem:[#allocation2 + $0x20] sm:$0xf]
        %v377 = vld [vmem:[#allocation2 + $0x24] sm:$0xf]
        %v378 = vld [vmem:[#allocation2 + $0x28] sm:$0xf]
        %v379 = vld [vmem:[#allocation2 + $0x2c] sm:$0xf]
        %v380 = vld [vmem:[#allocation2 + $0x30] sm:$0xf]
        %v381 = vld [vmem:[#allocation2 + $0x34] sm:$0xf]
        %v382 = vld [vmem:[#allocation2 + $0x38] sm:$0xf]
        %v383 = vld [vmem:[#allocation2 + $0x3c] sm:$0xf]
        %v400 = vunpack.c.l.b16 %v368
        %v401 = vunpack.c.l.b16 %v369
        %v402 = vunpack.c.l.b16 %v370
        %v403 = vunpack.c.l.b16 %v371
        %v404 = vunpack.c.l.b16 %v372
        %v405 = vunpack.c.l.b16 %v373
        %v406 = vunpack.c.l.b16 %v374
        %v407 = vunpack.c.l.b16 %v375
        %v408 = vunpack.c.l.b16 %v376
        %v409 = vunpack.c.l.b16 %v377
        %v410 = vunpack.c.l.b16 %v378
        %v411 = vunpack.c.l.b16 %v379
        %v412 = vunpack.c.l.b16 %v380
        %v413 = vunpack.c.l.b16 %v381
        %v414 = vunpack.c.l.b16 %v382
        %v415 = vunpack.c.l.b16 %v383
        %v416 = vpack.c.b16 %v401, %v400
        %v417 = vpack.c.b16 %v403, %v402
        %v418 = vpack.c.b16 %v405, %v404
        %v419 = vpack.c.b16 %v407, %v406
        %v420 = vpack.c.b16 %v409, %v408
        %v421 = vpack.c.b16 %v411, %v410
        %v422 = vpack.c.b16 %v413, %v412
        %v423 = vpack.c.b16 %v415, %v414
        %432 = vmatprep.subr.bf16.mxu0 0
        %433 = vmatpush1.bf16.msra.mxu0 %v423
        %434 = vmatprep.subr.bf16.mxu0 0
        %435 = vmatpush1.bf16.msra.mxu0 %v422
        %436 = vmatprep.subr.bf16.mxu0 0
        %437 = vmatpush1.bf16.msra.mxu0 %v421
        %438 = vmatprep.subr.bf16.mxu0 0
        %439 = vmatpush1.bf16.msra.mxu0 %v420
        %440 = vmatprep.subr.bf16.mxu0 0
        %441 = vmatpush1.bf16.msra.mxu0 %v419
        %442 = vmatprep.subr.bf16.mxu0 0
        %443 = vmatpush1.bf16.msra.mxu0 %v418
        %444 = vmatprep.subr.bf16.mxu0 0
        %445 = vmatpush1.bf16.msra.mxu0 %v417
        %446 = vmatprep.subr.bf16.mxu0 0
        %447 = vmatpush1.bf16.msra.mxu0 %v416
        %448 = vmatprep.subr.bf16.mxu0 0
        %449 = vmatpush2.bf16.msra.mxu0 0
        %450 = vmatprep.subr.bf16.mxu0 0
        %451 = vmatpush2.bf16.msra.mxu0 0
        %452 = vmatprep.subr.bf16.mxu0 0
        %453 = vmatpush2.bf16.msra.mxu0 0
        %454 = vmatprep.subr.bf16.mxu0 0
        %455 = vmatpush2.bf16.msra.mxu0 0
        %456 = vmatprep.subr.bf16.mxu0 0
        %457 = vmatpush2.bf16.msra.mxu0 0
        %458 = vmatprep.subr.bf16.mxu0 0
        %459 = vmatpush2.bf16.msra.mxu0 0
        %460 = vmatprep.subr.bf16.mxu0 0
        %461 = vmatpush2.bf16.msra.mxu0 0
        %462 = vmatprep.subr.bf16.mxu0 0
        %463 = vmatpush2.bf16.msra.mxu0 0
        %464 = vmatprep.mubr.bf16.mxu0 0
        %465 = vmatmul.mubr.bf16.gmra.mxu0 %v360
        %v466 = vpop.f32.mrf.mxu0
        %v467 = vadd.f32 0.0, %v466
        %v468 = vpop.f32.mrf.mxu0
        %v469 = vpop.f32.mrf.mxu0
        %v470 = vadd.f32 0.0, %v469
        %v471 = vpop.f32.mrf.mxu0
        %472 = vmatprep.mubr.bf16.mxu0 0
        %473 = vmatmul.mubr.bf16.gmra.mxu0 %v361
        %v474 = vpop.f32.mrf.mxu0
        %v475 = vadd.f32 0.0, %v474
        %v476 = vpop.f32.mrf.mxu0
        %v477 = vpop.f32.mrf.mxu0
        %v478 = vadd.f32 0.0, %v477
        %v479 = vpop.f32.mrf.mxu0
        %480 = vmatprep.mubr.bf16.mxu0 0
        %481 = vmatmul.mubr.bf16.gmra.mxu0 %v362
        %v482 = vpop.f32.mrf.mxu0
        %v483 = vadd.f32 0.0, %v482
        %v484 = vpop.f32.mrf.mxu0
        %v485 = vpop.f32.mrf.mxu0
        %v486 = vadd.f32 0.0, %v485
        %v487 = vpop.f32.mrf.mxu0
        %488 = vmatprep.mubr.bf16.mxu0 0
        %489 = vmatmul.mubr.bf16.gmra.mxu0 %v363
        %v490 = vpop.f32.mrf.mxu0
        %v491 = vadd.f32 0.0, %v490
        %v492 = vpop.f32.mrf.mxu0
        %v493 = vpop.f32.mrf.mxu0
        %v494 = vadd.f32 0.0, %v493
        %v495 = vpop.f32.mrf.mxu0
        %496 = vmatprep.mubr.bf16.mxu0 0
        %497 = vmatmul.mubr.bf16.gmra.mxu0 %v364
        %v498 = vpop.f32.mrf.mxu0
        %v499 = vadd.f32 0.0, %v498
        %v500 = vpop.f32.mrf.mxu0
        %v501 = vpop.f32.mrf.mxu0
        %v502 = vadd.f32 0.0, %v501
        %v503 = vpop.f32.mrf.mxu0
        %504 = vmatprep.mubr.bf16.mxu0 0
        %505 = vmatmul.mubr.bf16.gmra.mxu0 %v365
        %v506 = vpop.f32.mrf.mxu0
        %v507 = vadd.f32 0.0, %v506
        %v508 = vpop.f32.mrf.mxu0
        %v509 = vpop.f32.mrf.mxu0
        %v510 = vadd.f32 0.0, %v509
        %v511 = vpop.f32.mrf.mxu0
        %512 = vmatprep.mubr.bf16.mxu0 0
        %513 = vmatmul.mubr.bf16.gmra.mxu0 %v366
        %v514 = vpop.f32.mrf.mxu0
        %v515 = vadd.f32 0.0, %v514
        %v516 = vpop.f32.mrf.mxu0
        %v517 = vpop.f32.mrf.mxu0
        %v518 = vadd.f32 0.0, %v517
        %v519 = vpop.f32.mrf.mxu0
        %520 = vmatprep.mubr.bf16.mxu0 0
        %521 = vmatmul.mubr.bf16.gmra.mxu0 %v367
        %v522 = vpop.f32.mrf.mxu0
        %v523 = vadd.f32 0.0, %v522
        %v524 = vpop.f32.mrf.mxu0
        %v525 = vpop.f32.mrf.mxu0
        %v526 = vadd.f32 0.0, %v525
        %v527 = vpop.f32.mrf.mxu0
        %528 = vdwg.mxu0
        %v529 = vld [vmem:[%s276] sm:$0xff]
        %v530 = vld [vmem:[%s276 + $0x8] sm:$0xff]
        %v531 = vld [vmem:[%s276 + $0x10] sm:$0xff]
        %v532 = vld [vmem:[%s276 + $0x18] sm:$0xff]
        %v533 = vld [vmem:[%s276 + $0x20] sm:$0xff]
        %v534 = vld [vmem:[%s276 + $0x28] sm:$0xff]
        %v535 = vld [vmem:[%s276 + $0x30] sm:$0xff]
        %v536 = vld [vmem:[%s276 + $0x38] sm:$0xff]
        %v537 = vld [vmem:[%s276 + $0x40] sm:$0xff]
        %v538 = vld [vmem:[%s276 + $0x48] sm:$0xff]
        %v539 = vld [vmem:[%s276 + $0x50] sm:$0xff]
        %v540 = vld [vmem:[%s276 + $0x58] sm:$0xff]
        %v541 = vld [vmem:[%s276 + $0x60] sm:$0xff]
        %v542 = vld [vmem:[%s276 + $0x68] sm:$0xff]
        %v543 = vld [vmem:[%s276 + $0x70] sm:$0xff]
        %v544 = vld [vmem:[%s276 + $0x78] sm:$0xff]
        %546 = vset.pattern.permute.xlu0 0
        %547 = vperm.xlu0 %546, %v529
        %v548 = vpop.permute.xlu0 %547
        %551 = vset.pattern.permute.xlu0 0
        %552 = vperm.xlu0 %551, %v530
        %v553 = vpop.permute.xlu0 %552
        %556 = vset.pattern.permute.xlu0 0
        %557 = vperm.xlu0 %556, %v531
        %v558 = vpop.permute.xlu0 %557
        %561 = vset.pattern.permute.xlu0 0
        %562 = vperm.xlu0 %561, %v532
        %v563 = vpop.permute.xlu0 %562
        %566 = vset.pattern.permute.xlu0 0
        %567 = vperm.xlu0 %566, %v533
        %v568 = vpop.permute.xlu0 %567
        %571 = vset.pattern.permute.xlu0 0
        %572 = vperm.xlu0 %571, %v534
        %v573 = vpop.permute.xlu0 %572
        %576 = vset.pattern.permute.xlu0 0
        %577 = vperm.xlu0 %576, %v535
        %v578 = vpop.permute.xlu0 %577
        %581 = vset.pattern.permute.xlu0 0
        %582 = vperm.xlu0 %581, %v536
        %v583 = vpop.permute.xlu0 %582
        %586 = vset.pattern.permute.xlu0 0
        %587 = vperm.xlu0 %586, %v537
        %v588 = vpop.permute.xlu0 %587
        %591 = vset.pattern.permute.xlu0 0
        %592 = vperm.xlu0 %591, %v538
        %v593 = vpop.permute.xlu0 %592
        %596 = vset.pattern.permute.xlu0 0
        %597 = vperm.xlu0 %596, %v539
        %v598 = vpop.permute.xlu0 %597
        %601 = vset.pattern.permute.xlu0 0
        %602 = vperm.xlu0 %601, %v540
        %v603 = vpop.permute.xlu0 %602
        %606 = vset.pattern.permute.xlu0 0
        %607 = vperm.xlu0 %606, %v541
        %v608 = vpop.permute.xlu0 %607
        %611 = vset.pattern.permute.xlu0 0
        %612 = vperm.xlu0 %611, %v542
        %v613 = vpop.permute.xlu0 %612
        %616 = vset.pattern.permute.xlu0 0
        %617 = vperm.xlu0 %616, %v543
        %v618 = vpop.permute.xlu0 %617
        %621 = vset.pattern.permute.xlu0 0
        %622 = vperm.xlu0 %621, %v544
        %v623 = vpop.permute.xlu0 %622
        %v625 = vmul.f32 %v548, %v467
        %v626 = vmul.f32 %v553, %v470
        %v627 = vmul.f32 %v558, %v475
        %v628 = vmul.f32 %v563, %v478
        %v629 = vmul.f32 %v568, %v483
        %v630 = vmul.f32 %v573, %v486
        %v631 = vmul.f32 %v578, %v491
        %v632 = vmul.f32 %v583, %v494
        %v633 = vmul.f32 %v588, %v499
        %v634 = vmul.f32 %v593, %v502
        %v635 = vmul.f32 %v598, %v507
        %v636 = vmul.f32 %v603, %v510
        %v637 = vmul.f32 %v608, %v515
        %v638 = vmul.f32 %v613, %v518
        %v639 = vmul.f32 %v618, %v523
        %v640 = vmul.f32 %v623, %v526
        %v641 = vpack.c.bf16 %v626, %v625
        %v642 = vpack.c.bf16 %v628, %v627
        %v643 = vpack.c.bf16 %v630, %v629
        %v644 = vpack.c.bf16 %v632, %v631
        %v645 = vpack.c.bf16 %v634, %v633
        %v646 = vpack.c.bf16 %v636, %v635
        %v647 = vpack.c.bf16 %v638, %v637
        %v648 = vpack.c.bf16 %v640, %v639
        %v657 = vunpack.c.l.b16 %v641
        %v658 = vunpack.c.h.b16 %v641
        %v659 = vunpack.c.l.b16 %v642
        %v660 = vunpack.c.h.b16 %v642
        %v661 = vunpack.c.l.b16 %v643
        %v662 = vunpack.c.h.b16 %v643
        %v663 = vunpack.c.l.b16 %v644
        %v664 = vunpack.c.h.b16 %v644
        %v665 = vunpack.c.l.b16 %v645
        %v666 = vunpack.c.h.b16 %v645
        %v667 = vunpack.c.l.b16 %v646
        %v668 = vunpack.c.h.b16 %v646
        %v669 = vunpack.c.l.b16 %v647
        %v670 = vunpack.c.h.b16 %v647
        %v671 = vunpack.c.l.b16 %v648
        %v672 = vunpack.c.h.b16 %v648
        %v673 = vpack.c.b16 %v657, %v657
        %v674 = vpack.c.b16 %v658, %v658
        %v675 = vpack.c.b16 %v659, %v659
        %v676 = vpack.c.b16 %v660, %v660
        %v677 = vpack.c.b16 %v661, %v661
        %v678 = vpack.c.b16 %v662, %v662
        %v679 = vpack.c.b16 %v663, %v663
        %v680 = vpack.c.b16 %v664, %v664
        %v681 = vpack.c.b16 %v665, %v665
        %v682 = vpack.c.b16 %v666, %v666
        %v683 = vpack.c.b16 %v667, %v667
        %v684 = vpack.c.b16 %v668, %v668
        %v685 = vpack.c.b16 %v669, %v669
        %v686 = vpack.c.b16 %v670, %v670
        %v687 = vpack.c.b16 %v671, %v671
        %v688 = vpack.c.b16 %v672, %v672
        %705 = vst [vmem:[%s259] sm:$0xf] %v673
        %706 = vst [vmem:[%s259 + $0x4] sm:$0xf] %v674
        %707 = vst [vmem:[%s259 + $0x8] sm:$0xf] %v675
        %708 = vst [vmem:[%s259 + $0xc] sm:$0xf] %v676
        %709 = vst [vmem:[%s259 + $0x10] sm:$0xf] %v677
        %710 = vst [vmem:[%s259 + $0x14] sm:$0xf] %v678
        %711 = vst [vmem:[%s259 + $0x18] sm:$0xf] %v679
        %712 = vst [vmem:[%s259 + $0x1c] sm:$0xf] %v680
        %713 = vst [vmem:[%s259 + $0x20] sm:$0xf] %v681
        %714 = vst [vmem:[%s259 + $0x24] sm:$0xf] %v682
        %715 = vst [vmem:[%s259 + $0x28] sm:$0xf] %v683
        %716 = vst [vmem:[%s259 + $0x2c] sm:$0xf] %v684
        %717 = vst [vmem:[%s259 + $0x30] sm:$0xf] %v685
        %718 = vst [vmem:[%s259 + $0x34] sm:$0xf] %v686
        %719 = vst [vmem:[%s259 + $0x38] sm:$0xf] %v687
        %720 = vst [vmem:[%s259 + $0x3c] sm:$0xf] %v688
        %s721 = sand.u32 %s145, 1
        %s722 = scalar_lea.sflag [#allocation4], %s721
        %s723 = sand.u32 %s145, 1
        %s724 = smul.addr %s723, 64
        %s725 = scalar_lea.vmem [#allocation5], %s724
        // Predicated region
        $region41: #{tpu_custom_call.1} parent=35 // pred_check
          %p726 = pneg %p155
        $region42: #{tpu_custom_call.1} parent=35 // pred_check_branch
          %728 = sbr.rel (%p726) target = $region44
        $region43: #{tpu_custom_call.1} parent=35 // pred_region
          %s729 = smul.u32 16, %s23
          %s731 = ssub.s32 1024, 1024
          %732 = vsyncadd %s722, %s731
          %s733 = sadd.s32 %s24, %s729
          %s734 = smul.addr %s733, 64
          %s735 = scalar_lea.hbm %s4, %s734
          %s736 = sshll.u32 %s725, 4
          %s737 = int_to_ptr.vmem [resolvable:$true] %s736
          %742 = dma.vmem_to_hbm [thread:$0]  %s737, 1024, %s735, %s722, 64, 64, 4
        $region44: #{tpu_custom_call.1} parent=35 // pred_fallthru
          _
      $region36: #{tpu_custom_call.1} parent=5 // pred_fallthru
        _
      %p743 = scmp.le.s32.totalorder 2, %s14
      // Predicated region
      $region45: #{tpu_custom_call.1} parent=5 // pred_check
        %p744 = pneg %p743
      $region46: #{tpu_custom_call.1} parent=5 // pred_check_branch
        %746 = sbr.rel (%p744) target = $region48
      $region47: #{tpu_custom_call.1} parent=5 // pred_region
        %s747 = ssub.s32 %s14, 2
        // Predicated region
        $region49: #{tpu_custom_call.1} parent=47 // pred_check
          %p748 = pneg %p161
        $region50: #{tpu_custom_call.1} parent=47 // pred_check_branch
          %750 = sbr.rel (%p748) target = $region52
        $region51: #{tpu_custom_call.1} parent=47 // pred_region
          %s751 = sand.u32 %s146, 1
          %s752 = scalar_lea.sflag [#allocation4], %s751
          %s753 = sand.u32 %s146, 1
          %s754 = smul.addr %s753, 64
          %s755 = scalar_lea.vmem [#allocation5], %s754
          %756 = dma.done %s752, 1024
        $region52: #{tpu_custom_call.1} parent=47 // pred_fallthru
          _
      $region48: #{tpu_custom_call.1} parent=5 // pred_fallthru
        _
    $region6: #{tpu_custom_call.1} parent=1 // loop_footer
      %s18 = sadd.s32 1, %s14
    $region7: #{tpu_custom_call.1} parent=1 // loop_footer_branch
      %13 = sbr.rel target = $region3
    $region8: #{tpu_custom_call.1} parent=1 // loop_exit
      _
    %757 = vsyncpa [#allocation3], 1
    %s758 = scalar_lea.sflag [#allocation3], 1
    %759 = vsyncpa %s758, 1
    %760 = vsyncpa [#allocation4], 1
    %s761 = scalar_lea.sflag [#allocation4], 1
    %762 = vsyncpa %s761, 1

</llo_original>
